<compile_context>
chip_gen: v7x
topology: tpu7x:2x2x1
jax: 0.10.0
libtpu: 0.0.40
codegen_flags: <defaults>
</compile_context>

<pallas_src>
import functools

import jax
import jax.numpy as jnp
from jax.experimental import pallas as pl
from jax.experimental.pallas import tpu as pltpu

ALPHA = 0.25
GAMMA = 2.0
LANES = 128
MAX_TILE_ROWS = 1024   # 1024 * 128 * 4 B = 512 KiB per input tile; x2 inputs x2 buffers = 2 MiB VMEM
NUM_CORES = 2          # shard the reduction over 2 TensorCores on v7x; sequential (free) elsewhere

# Padding values whose focal-loss contribution is exactly 0.0 in f32:
#   x=50, t=1 -> p=1, ce=log1p(exp(-50)), p_t=1, (1-p_t)^gamma = 0 -> loss = 0
_PAD_X = 50.0
_PAD_T = 1.0


def _round_up(n, m):
    return ((n + m - 1) // m) * m


def _focal_loss_kernel(x_ref, t_ref, out_ref, acc_ref, *, alpha, gamma):
    i = pl.program_id(1)

    @pl.when(i == 0)
    def _():
        acc_ref[...] = jnp.zeros_like(acc_ref)

    x = x_ref[...].astype(jnp.float32)
    t = t_ref[...].astype(jnp.float32)

    # One exp + one log1p + one divide per element; sigmoid reuses the same exp.
    e = jnp.exp(-jnp.abs(x))                         # EUP
    inv = 1.0 / (1.0 + e)                            # EUP
    p = jnp.where(x >= 0.0, inv, e * inv)            # sigmoid(x) (VPU select)
    # numerically-stable BCE-with-logits (== F.binary_cross_entropy_with_logits)
    ce = jnp.maximum(x, 0.0) - x * t + jnp.log1p(e)  # EUP log1p

    p_t = p * t + (1.0 - p) * (1.0 - t)
    one_minus_pt = 1.0 - p_t

    g = float(gamma)
    if g == int(g) and 0 < int(g) <= 8:
        # small integer gamma (default 2.0): plain VPU multiplies, no pow
        mod = one_minus_pt
        for _ in range(int(g) - 1):
            mod = mod * one_minus_pt
    else:
        mod = one_minus_pt ** g                      # fallback: exp(g*log(.))

    alpha_t = alpha * t + (1.0 - alpha) * (1.0 - t)
    loss = alpha_t * ce * mod

    # Per-tile partial reduce (tile_rows, 128) -> (8, 128): pure VPU adds,
    # no XLU and no scalar round-trip in the steady-state loop.
    acc_ref[...] += loss.reshape(-1, 8, LANES).sum(axis=0)

    # Emit this core's partial-sum vector once, on the last tile.
    @pl.when(i == pl.num_programs(1) - 1)
    def _():
        out_ref[...] = acc_ref[...].reshape(1, 8, LANES)


def focal_loss(inputs, targets, alpha=ALPHA, gamma=GAMMA):
    """Sigmoid focal loss with 'mean' reduction. inputs/targets: same shape."""
    assert inputs.shape == targets.shape
    total = inputs.size

    rows = pl.cdiv(total, LANES)
    tile_rows = min(MAX_TILE_ROWS, _round_up(max(rows, 1), 8))
    tiles_per_core = pl.cdiv(rows, NUM_CORES * tile_rows)
    padded_rows = NUM_CORES * tiles_per_core * tile_rows
    pad = padded_rows * LANES - total

    x_flat = inputs.reshape(-1)
    t_flat = targets.reshape(-1)
    if pad:
        # zero-loss padding (see _PAD_X/_PAD_T above); mean still divides by `total`
        x_flat = jnp.concatenate([x_flat, jnp.full((pad,), _PAD_X, x_flat.dtype)])
        t_flat = jnp.concatenate([t_flat, jnp.full((pad,), _PAD_T, t_flat.dtype)])
    x2d = x_flat.reshape(padded_rows, LANES)
    t2d = t_flat.reshape(padded_rows, LANES)

    kernel = functools.partial(
        _focal_loss_kernel, alpha=float(alpha), gamma=float(gamma)
    )

    partials = pl.pallas_call(
        kernel,
        out_shape=jax.ShapeDtypeStruct((NUM_CORES, 8, LANES), jnp.float32),
        grid_spec=pltpu.PrefetchScalarGridSpec(
            num_scalar_prefetch=0,
            grid=(NUM_CORES, tiles_per_core),
            in_specs=[
                pl.BlockSpec((tile_rows, LANES),
                             lambda c, i: (c * tiles_per_core + i, 0)),
                pl.BlockSpec((tile_rows, LANES),
                             lambda c, i: (c * tiles_per_core + i, 0)),
            ],
            out_specs=pl.BlockSpec((1, 8, LANES), lambda c, i: (c, 0, 0)),
            scratch_shapes=[pltpu.VMEM((8, LANES), jnp.float32)],
        ),
        compiler_params=pltpu.CompilerParams(
            dimension_semantics=("parallel", "arbitrary"),
        ),
    )(x2d, t2d)

    # Single tiny cross-lane reduce + mean, outside the hot loop.
    return jnp.sum(partials) / jnp.float32(total)


def _reference_focal_loss(inputs, targets, alpha=ALPHA, gamma=GAMMA):
    x = inputs.astype(jnp.float32)
    t = targets.astype(jnp.float32)
    p = jax.nn.sigmoid(x)
    ce = jnp.maximum(x, 0.0) - x * t + jnp.log1p(jnp.exp(-jnp.abs(x)))
    p_t = p * t + (1.0 - p) * (1.0 - t)
    loss = ce * (1.0 - p_t) ** gamma
    alpha_t = alpha * t + (1.0 - alpha) * (1.0 - t)
    return jnp.mean(alpha_t * loss)


if __name__ == "__main__":
    key = jax.random.PRNGKey(0)
    k1, k2 = jax.random.split(key)
    # NCHW, matches the PyTorch module's typical detection-head usage
    B, C, H, W = 2, 4, 16, 16
    inputs = jax.random.normal(k1, (B, C, H, W), dtype=jnp.float32)  # logits
    targets = jax.random.bernoulli(k2, 0.3, (B, C, H, W)).astype(jnp.float32)

    out = focal_loss(inputs, targets)
    out = jax.block_until_ready(out)

    ref = _reference_focal_loss(inputs, targets)
    assert jnp.allclose(out, ref, rtol=1e-5, atol=1e-6), (out, ref)
    print("KERNEL_OK")
</pallas_src>

<mosaic_0001>
module attributes {stable_mosaic.version = 11 : i64} {
  func.func @_focal_loss_kernel(%arg0: i32, %arg1: i32, %arg2: memref<16x128xf32, #tpu.memory_space<vmem>>, %arg3: memref<16x128xf32, #tpu.memory_space<vmem>>, %arg4: memref<1x8x128xf32, #tpu.memory_space<vmem>>, %arg5: memref<8x128xf32, #tpu.memory_space<vmem>>) attributes {dimension_semantics = [#tpu.dimension_semantics<parallel>, #tpu.dimension_semantics<arbitrary>], iteration_bounds = array<i64: 2, 1>, scalar_prefetch = 0 : i64, scratch_operands = 1 : i64, tpu.core_type = #tpu.core_type<tc>, window_params = [{transform_indices = @transform_0, window_bounds = array<i64: 16, 128>}, {transform_indices = @transform_1, window_bounds = array<i64: 16, 128>}, {transform_indices = @transform_2, window_bounds = array<i64: 1, 8, 128>}]} {
    %c0_i32 = arith.constant 0 : i32
    %0 = arith.cmpi eq, %arg1, %c0_i32 : i32
    %1 = arith.extui %0 : i1 to i32
    %c0_i32_0 = arith.constant 0 : i32
    %2 = arith.cmpi ne, %1, %c0_i32_0 : i32
    scf.if %2 {
      %cst_21 = arith.constant 0.000000e+00 : f32
      %50 = vector.broadcast %cst_21 : f32 to vector<8x128xf32>
      %c0_22 = arith.constant 0 : index
      %c0_23 = arith.constant 0 : index
      %51 = vector.load %arg5[%c0_22, %c0_23] : memref<8x128xf32, #tpu.memory_space<vmem>>, vector<8x128xf32>
      tpu.vector_store %arg5[%c0_22, %c0_23], %50 {strides = array<i32>} : memref<8x128xf32, #tpu.memory_space<vmem>>, vector<8x128xf32>,
    } else {
    }
    %c0 = arith.constant 0 : index
    %c0_1 = arith.constant 0 : index
    %3 = vector.load %arg2[%c0, %c0_1] : memref<16x128xf32, #tpu.memory_space<vmem>>, vector<16x128xf32>
    %c0_2 = arith.constant 0 : index
    %c0_3 = arith.constant 0 : index
    %4 = vector.load %arg3[%c0_2, %c0_3] : memref<16x128xf32, #tpu.memory_space<vmem>>, vector<16x128xf32>
    %5 = math.absf %3 : vector<16x128xf32>
    %cst = arith.constant 0.000000e+00 : f32
    %6 = vector.broadcast %cst : f32 to vector<16x128xf32>
    %7 = arith.subf %6, %5 : vector<16x128xf32>
    %8 = math.exp %7 : vector<16x128xf32>
    %cst_4 = arith.constant 1.000000e+00 : f32
    %9 = vector.broadcast %cst_4 : f32 to vector<16x128xf32>
    %10 = arith.addf %9, %8 : vector<16x128xf32>
    %cst_5 = arith.constant 1.000000e+00 : f32
    %11 = vector.broadcast %cst_5 : f32 to vector<16x128xf32>
    %12 = arith.divf %11, %10 : vector<16x128xf32>
    %cst_6 = arith.constant 0.000000e+00 : f32
    %13 = vector.broadcast %cst_6 : f32 to vector<16x128xf32>
    %14 = arith.cmpf oge, %3, %13 : vector<16x128xf32>
    %15 = arith.mulf %8, %12 : vector<16x128xf32>
    %16 = arith.select %14, %12, %15 : vector<16x128xi1>, vector<16x128xf32>
    %cst_7 = arith.constant 0.000000e+00 : f32
    %17 = vector.broadcast %cst_7 : f32 to vector<16x128xf32>
    %18 = arith.maximumf %3, %17 : vector<16x128xf32>
    %19 = arith.mulf %3, %4 : vector<16x128xf32>
    %20 = arith.subf %18, %19 : vector<16x128xf32>
    %21 = math.log1p %8 : vector<16x128xf32>
    %22 = arith.addf %20, %21 : vector<16x128xf32>
    %23 = arith.mulf %16, %4 : vector<16x128xf32>
    %cst_8 = arith.constant 1.000000e+00 : f32
    %24 = vector.broadcast %cst_8 : f32 to vector<16x128xf32>
    %25 = arith.subf %24, %16 : vector<16x128xf32>
    %cst_9 = arith.constant 1.000000e+00 : f32
    %26 = vector.broadcast %cst_9 : f32 to vector<16x128xf32>
    %27 = arith.subf %26, %4 : vector<16x128xf32>
    %28 = arith.mulf %25, %27 : vector<16x128xf32>
    %29 = arith.addf %23, %28 : vector<16x128xf32>
    %cst_10 = arith.constant 1.000000e+00 : f32
    %30 = vector.broadcast %cst_10 : f32 to vector<16x128xf32>
    %31 = arith.subf %30, %29 : vector<16x128xf32>
    %32 = arith.mulf %31, %31 : vector<16x128xf32>
    %cst_11 = arith.constant 2.500000e-01 : f32
    %33 = vector.broadcast %cst_11 : f32 to vector<16x128xf32>
    %34 = arith.mulf %33, %4 : vector<16x128xf32>
    %cst_12 = arith.constant 1.000000e+00 : f32
    %35 = vector.broadcast %cst_12 : f32 to vector<16x128xf32>
    %36 = arith.subf %35, %4 : vector<16x128xf32>
    %cst_13 = arith.constant 7.500000e-01 : f32
    %37 = vector.broadcast %cst_13 : f32 to vector<16x128xf32>
    %38 = arith.mulf %37, %36 : vector<16x128xf32>
    %39 = arith.addf %34, %38 : vector<16x128xf32>
    %40 = arith.mulf %39, %22 : vector<16x128xf32>
    %41 = arith.mulf %40, %32 : vector<16x128xf32>
    %c0_14 = arith.constant 0 : index
    %c0_15 = arith.constant 0 : index
    %42 = vector.load %arg5[%c0_14, %c0_15] : memref<8x128xf32, #tpu.memory_space<vmem>>, vector<8x128xf32>
    %43 = vector.shape_cast %41 : vector<16x128xf32> to vector<2x8x128xf32>
    %cst_16 = arith.constant dense<0.000000e+00> : vector<8x128xf32>
    %44 = vector.multi_reduction <add>, %43, %cst_16 [0] : vector<2x8x128xf32> to vector<8x128xf32>
    %45 = arith.addf %42, %44 : vector<8x128xf32>
    %c0_17 = arith.constant 0 : index
    %c0_18 = arith.constant 0 : index
    %46 = vector.load %arg5[%c0_17, %c0_18] : memref<8x128xf32, #tpu.memory_space<vmem>>, vector<8x128xf32>
    tpu.vector_store %arg5[%c0_17, %c0_18], %45 {strides = array<i32>} : memref<8x128xf32, #tpu.memory_space<vmem>>, vector<8x128xf32>,
    %c0_i32_19 = arith.constant 0 : i32
    %47 = arith.cmpi eq, %arg1, %c0_i32_19 : i32
    %48 = arith.extui %47 : i1 to i32
    %c0_i32_20 = arith.constant 0 : i32
    %49 = arith.cmpi ne, %48, %c0_i32_20 : i32
    scf.if %49 {
      %c0_21 = arith.constant 0 : index
      %c0_22 = arith.constant 0 : index
      %50 = vector.load %arg5[%c0_21, %c0_22] : memref<8x128xf32, #tpu.memory_space<vmem>>, vector<8x128xf32>
      %51 = vector.shape_cast %50 : vector<8x128xf32> to vector<1x8x128xf32>
      %c0_23 = arith.constant 0 : index
      %c0_24 = arith.constant 0 : index
      %c0_25 = arith.constant 0 : index
      %52 = vector.load %arg4[%c0_23, %c0_24, %c0_25] : memref<1x8x128xf32, #tpu.memory_space<vmem>>, vector<1x8x128xf32>
      tpu.vector_store %arg4[%c0_23, %c0_24, %c0_25], %51 {strides = array<i32>} : memref<1x8x128xf32, #tpu.memory_space<vmem>>, vector<1x8x128xf32>,
    } else {
    }
    return
  }
  func.func @transform_0(%arg0: i32, %arg1: i32) -> (i32, i32) {
    %c1_i32 = arith.constant 1 : i32
    %0 = arith.muli %arg0, %c1_i32 : i32
    %1 = arith.addi %0, %arg1 : i32
    %c0_i32 = arith.constant 0 : i32
    %c0_i32_0 = arith.constant 0 : i32
    return %1, %c0_i32 : i32, i32
  }
  func.func @transform_1(%arg0: i32, %arg1: i32) -> (i32, i32) {
    %c1_i32 = arith.constant 1 : i32
    %0 = arith.muli %arg0, %c1_i32 : i32
    %1 = arith.addi %0, %arg1 : i32
    %c0_i32 = arith.constant 0 : i32
    %c0_i32_0 = arith.constant 0 : i32
    return %1, %c0_i32 : i32, i32
  }
  func.func @transform_2(%arg0: i32, %arg1: i32) -> (i32, i32, i32) {
    %c0_i32 = arith.constant 0 : i32
    %c0_i32_0 = arith.constant 0 : i32
    %c0_i32_1 = arith.constant 0 : i32
    return %arg0, %c0_i32, %c0_i32_0 : i32, i32, i32
  }
}

</mosaic_0001>

<llo_original>
// kernel: tpu_custom_call.1
$region0: #{tpu_custom_call.1}
  #allocation0 [shape = 'u32[]', space=smem, size = 0x4, offset = 0x4, fixed_abs, tag = 'smem constant byte address 0x4 - core index']
  #allocation1 [shape = 'u32[144,128]{1,0:T(1,128)}', space=vmem, size = 0x12000, scoped, tag = 'internal scratch']
  #allocation2 [shape = 'f32[8,128]{1,0:T(8,128)}', space=vmem, size = 0x1000, scoped, tag = 'scratch operand']
  %s0 = inlined_call_operand.hbm [shape: f32[32,128], index: 0, kind: input, shape index: {}]
  %s1 = inlined_call_operand.hbm [shape: f32[32,128], index: 1, kind: input, shape index: {}]
  %s2 = inlined_call_operand.hbm [shape: f32[2,8,128], index: 2, kind: output, shape index: {}]
  %s3 = sld [smem:[#allocation0]]
  $region57: #{tpu_custom_call.1} parent=0
    _
  %s5 = ssub.s32 1, %s3
  %s6 = scalar_select 0, %s5, %s3
  $region1: #{tpu_custom_call.1} parent=0
    #allocation3 [shape = 'u8[16384]{0}', space=vmem, size = 0x4000, scoped, tag = 'input window, operand 0']
    #allocation4 [shape = 's32[2]{0}', space=sflag, size = 0x8, scoped, tag = 'scoped memory for tpu_custom_call.1']
    #allocation5 [shape = 's32[2]{0}', space=sflag, size = 0x8, scoped, tag = 'scoped memory for tpu_custom_call.1']
    #allocation6 [shape = 'u8[16384]{0}', space=vmem, size = 0x4000, scoped, tag = 'input window, operand 1']
    #allocation7 [shape = 's32[2]{0}', space=sflag, size = 0x8, scoped, tag = 'scoped memory for tpu_custom_call.1']
    #allocation8 [shape = 'u8[8192]{0}', space=vmem, size = 0x2000, scoped, tag = 'output window, operand 0']
    %7 = vsyncpa [#allocation4], 0
    %s8 = scalar_lea.sflag [#allocation4], 1
    %9 = vsyncpa %s8, 0
    %10 = vsyncpa [#allocation7], 0
    %s11 = scalar_lea.sflag [#allocation7], 1
    %12 = vsyncpa %s11, 0
    %13 = vsyncpa [#allocation5], 0
    %s14 = scalar_lea.sflag [#allocation5], 1
    %15 = vsyncpa %s14, 0
    loop: start=0, step=1, limit=4
    $region2: #{tpu_custom_call.1} parent=1 // loop_pre_header
      _
    $region3: #{tpu_custom_call.1} parent=1 // loop_header
      %s17 = sphi 0, %s21
      %p18 = scmp.ge.s32.totalorder %s17, 4
      %s24 = sphi 0, %s36
      %s25 = sphi 0, %s32
      %s26 = sphi 0, %s24
      %s27 = sphi 0, %s25
      %s28 = sphi 0, %s26
      %s29 = sphi 0, %s27
      %s41 = sphi 0, %s43
      %s44 = sphi 0, %s41
      %s45 = sphi 0, %s44
      %s61 = sphi 0, %s45
      %s69 = sphi 0, %s71
      %s72 = sphi 0, %s69
      %s73 = sphi 0, %s72
      %s89 = sphi 0, %s73
      %s95 = sphi 0, %s97
      %s98 = sphi 0, %s95
      %s99 = sphi 0, %s98
      %s115 = sphi 0, %s99
    $region4: #{tpu_custom_call.1} parent=1 // loop_header_branch
      %20 = sbr.rel (%p18) target = $region8
    $region5: #{tpu_custom_call.1} parent=1 // loop_body
      %s22 = ssub.s32 %s17, 1
      %s23 = ssub.s32 %s17, 2
      %s30 = sadd.s32 1, %s25
      %p31 = scmp.ge.s32.totalorder %s30, 1
      %s32 = scalar_select %p31, 0, %s30
      %s33 = sadd.s32 1, %s24
      %s34 = scalar_select %p31, %s33, %s24
      %p35 = scmp.ge.s32.totalorder %s34, 2
      %s36 = scalar_select %p35, 0, %s34
      %s37 = sadd.s32 %s24, %s25
      %s38 = sadd.s32 %s36, %s32
      %s39 = ssub.s32 %s37, %s38
      %p40 = scmp.eq.s32.totalorder %s39, 0
      %s42 = sadd.s32 %s41, 1
      %s43 = scalar_select %p40, %s41, %s42
      %p46 = pneg %p40
      %p47 = scmp.eq.s32.totalorder %s17, 1
      %p48 = por %p46, %p47
      %p49 = scmp.ne.s32.totalorder %s41, %s44
      %p50 = scmp.eq.s32.totalorder %s17, 0
      %p51 = por %p49, %p50
      %p52 = scmp.ne.s32.totalorder %s41, %s44
      %p53 = scmp.eq.s32.totalorder %s22, 1
      %p54 = por %p52, %p53
      %p55 = scmp.ne.s32.totalorder %s44, %s45
      %p56 = scmp.eq.s32.totalorder %s22, 0
      %p57 = por %p55, %p56
      %p58 = scmp.ne.s32.totalorder %s44, %s45
      %p59 = scmp.eq.s32.totalorder %s23, 1
      %p60 = por %p58, %p59
      %p62 = scmp.ne.s32.totalorder %s45, %s61
      %p63 = scmp.eq.s32.totalorder %s23, 0
      %p64 = por %p62, %p63
      %s65 = sadd.s32 %s24, %s25
      %s66 = sadd.s32 %s36, %s32
      %s67 = ssub.s32 %s65, %s66
      %p68 = scmp.eq.s32.totalorder %s67, 0
      %s70 = sadd.s32 %s69, 1
      %s71 = scalar_select %p68, %s69, %s70
      %p74 = pneg %p68
      %p75 = scmp.eq.s32.totalorder %s17, 1
      %p76 = por %p74, %p75
      %p77 = scmp.ne.s32.totalorder %s69, %s72
      %p78 = scmp.eq.s32.totalorder %s17, 0
      %p79 = por %p77, %p78
      %p80 = scmp.ne.s32.totalorder %s69, %s72
      %p81 = scmp.eq.s32.totalorder %s22, 1
      %p82 = por %p80, %p81
      %p83 = scmp.ne.s32.totalorder %s72, %s73
      %p84 = scmp.eq.s32.totalorder %s22, 0
      %p85 = por %p83, %p84
      %p86 = scmp.ne.s32.totalorder %s72, %s73
      %p87 = scmp.eq.s32.totalorder %s23, 1
      %p88 = por %p86, %p87
      %p90 = scmp.ne.s32.totalorder %s73, %s89
      %p91 = scmp.eq.s32.totalorder %s23, 0
      %p92 = por %p90, %p91
      %s93 = ssub.s32 %s24, %s36
      %p94 = scmp.eq.s32.totalorder %s93, 0
      %s96 = sadd.s32 %s95, 1
      %s97 = scalar_select %p94, %s95, %s96
      %p100 = pneg %p94
      %p101 = scmp.eq.s32.totalorder %s17, 1
      %p102 = por %p100, %p101
      %p103 = scmp.ne.s32.totalorder %s95, %s98
      %p104 = scmp.eq.s32.totalorder %s17, 0
      %p105 = por %p103, %p104
      %p106 = scmp.ne.s32.totalorder %s95, %s98
      %p107 = scmp.eq.s32.totalorder %s22, 1
      %p108 = por %p106, %p107
      %p109 = scmp.ne.s32.totalorder %s98, %s99
      %p110 = scmp.eq.s32.totalorder %s22, 0
      %p111 = por %p109, %p110
      %p112 = scmp.ne.s32.totalorder %s98, %s99
      %p113 = scmp.eq.s32.totalorder %s23, 1
      %p114 = por %p112, %p113
      %p116 = scmp.ne.s32.totalorder %s99, %s115
      %p117 = scmp.eq.s32.totalorder %s23, 0
      %p118 = por %p116, %p117
      %p119 = scmp.le.s32.totalorder 1, %s17
      %p120 = scmp.lt.s32.totalorder %s17, 3
      %p121 = pnand %p119, %p120
      %p122 = pneg %p121
      // Predicated region
      $region9: #{tpu_custom_call.1} parent=5 // pred_check
        _
      $region10: #{tpu_custom_call.1} parent=5 // pred_check_branch
        %124 = sbr.rel (%p121) target = $region12
      $region11: #{tpu_custom_call.1} parent=5 // pred_region
        %s125 = ssub.s32 %s17, 1
      $region12: #{tpu_custom_call.1} parent=5 // pred_fallthru
        _
      %p126 = scmp.lt.s32.totalorder %s17, 2
      // Predicated region
      $region13: #{tpu_custom_call.1} parent=5 // pred_check
        %p127 = pneg %p126
      $region14: #{tpu_custom_call.1} parent=5 // pred_check_branch
        %129 = sbr.rel (%p127) target = $region16
      $region15: #{tpu_custom_call.1} parent=5 // pred_region
        // Predicated region
        $region17: #{tpu_custom_call.1} parent=15 // pred_check
          %p130 = pneg %p51
        $region18: #{tpu_custom_call.1} parent=15 // pred_check_branch
          %132 = sbr.rel (%p130) target = $region20
        $region19: #{tpu_custom_call.1} parent=15 // pred_region
          %s133 = sand.u32 %s41, 1
          %s134 = scalar_lea.sflag [#allocation4], %s133
          %s135 = sand.u32 %s41, 1
          %s136 = smul.addr %s135, 16
          %s137 = scalar_lea.vmem [#allocation3], %s136
          %s138 = sadd.s32 %s24, %s25
          %s139 = smul.u32 2, %s138
          %s141 = ssub.s32 256, 256
          %142 = vsyncadd %s134, %s141
          %s143 = smul.addr %s139, 128
          %s144 = scalar_lea.hbm %s0, %s143
          %s145 = sshll.u32 %s137, 4
          %s146 = int_to_ptr.vmem [resolvable:$true] %s145
          %151 = dma.hbm_to_vmem [thread:$0]  %s144, 256, %s146, %s134, 128, 128, 8
        $region20: #{tpu_custom_call.1} parent=15 // pred_fallthru
          _
        // Predicated region
        $region21: #{tpu_custom_call.1} parent=15 // pred_check
          %p152 = pneg %p79
        $region22: #{tpu_custom_call.1} parent=15 // pred_check_branch
          %154 = sbr.rel (%p152) target = $region24
        $region23: #{tpu_custom_call.1} parent=15 // pred_region
          %s155 = sand.u32 %s69, 1
          %s156 = scalar_lea.sflag [#allocation7], %s155
          %s157 = sand.u32 %s69, 1
          %s158 = smul.addr %s157, 16
          %s159 = scalar_lea.vmem [#allocation6], %s158
          %s160 = sadd.s32 %s24, %s25
          %s161 = smul.u32 2, %s160
          %s163 = ssub.s32 256, 256
          %164 = vsyncadd %s156, %s163
          %s165 = smul.addr %s161, 128
          %s166 = scalar_lea.hbm %s1, %s165
          %s167 = sshll.u32 %s159, 4
          %s168 = int_to_ptr.vmem [resolvable:$true] %s167
          %173 = dma.hbm_to_vmem [thread:$0]  %s166, 256, %s168, %s156, 128, 128, 8
        $region24: #{tpu_custom_call.1} parent=15 // pred_fallthru
          _
      $region16: #{tpu_custom_call.1} parent=5 // pred_fallthru
        _
      %p174 = scmp.le.s32.totalorder 1, %s17
      %p175 = scmp.lt.s32.totalorder %s17, 3
      %p176 = pnand %p174, %p175
      %p177 = pneg %p176
      // Predicated region
      $region25: #{tpu_custom_call.1} parent=5 // pred_check
        _
      $region26: #{tpu_custom_call.1} parent=5 // pred_check_branch
        %179 = sbr.rel (%p176) target = $region28
      $region27: #{tpu_custom_call.1} parent=5 // pred_region
        %s180 = ssub.s32 %s17, 1
        %s181 = sand.u32 %s44, 1
        %s182 = scalar_lea.sflag [#allocation4], %s181
        %s183 = sand.u32 %s44, 1
        %s184 = smul.addr %s183, 16
        %s185 = scalar_lea.vmem [#allocation3], %s184
        // Predicated region
        $region29: #{tpu_custom_call.1} parent=27 // pred_check
          %p186 = pneg %p57
        $region30: #{tpu_custom_call.1} parent=27 // pred_check_branch
          %188 = sbr.rel (%p186) target = $region32
        $region31: #{tpu_custom_call.1} parent=27 // pred_region
          %189 = dma.done %s182, 256
        $region32: #{tpu_custom_call.1} parent=27 // pred_fallthru
          _
        %s190 = sand.u32 %s72, 1
        %s191 = scalar_lea.sflag [#allocation7], %s190
        %s192 = sand.u32 %s72, 1
        %s193 = smul.addr %s192, 16
        %s194 = scalar_lea.vmem [#allocation6], %s193
        // Predicated region
        $region33: #{tpu_custom_call.1} parent=27 // pred_check
          %p195 = pneg %p85
        $region34: #{tpu_custom_call.1} parent=27 // pred_check_branch
          %197 = sbr.rel (%p195) target = $region36
        $region35: #{tpu_custom_call.1} parent=27 // pred_region
          %198 = dma.done %s191, 256
        $region36: #{tpu_custom_call.1} parent=27 // pred_fallthru
          _
        %s199 = sand.u32 %s44, 1
        %s200 = scalar_lea.sflag [#allocation4], %s199
        %s201 = sand.u32 %s44, 1
        %s202 = smul.addr %s201, 16
        %s203 = scalar_lea.vmem [#allocation3], %s202
        %p204 = pneg %p57
        %p205 = pneg %p54
        %s206 = sand.u32 %s72, 1
        %s207 = scalar_lea.sflag [#allocation7], %s206
        %s208 = sand.u32 %s72, 1
        %s209 = smul.addr %s208, 16
        %s210 = scalar_lea.vmem [#allocation6], %s209
        %p211 = pneg %p85
        %p212 = pneg %p82
        %p213 = pneg %p111
        %p214 = pneg %p108
        %s215 = sand.u32 %s98, 1
        %s216 = scalar_lea.sflag [#allocation5], %s215
        %s217 = sand.u32 %s98, 1
        %s218 = smul.addr %s217, 8
        %s219 = scalar_lea.vmem [#allocation8], %s218
        %s220 = sadd.s32 %s26, %s27
        %s221 = smul.u32 2, %s220
        %s222 = sadd.s32 %s26, %s27
        %s223 = smul.u32 2, %s222
        %p224 = scmp.eq.s32.totalorder %s27, 0
        // Predicated region
        $region37: #{tpu_custom_call.1} parent=27 // pred_check
          %p225 = pneg %p224
        $region38: #{tpu_custom_call.1} parent=27 // pred_check_branch
          %227 = sbr.rel (%p225) target = $region40
        $region39: #{tpu_custom_call.1} parent=27 // pred_region
          %228 = vst [vmem:[#allocation2] sm:$0xff] 0.0
        $region40: #{tpu_custom_call.1} parent=27 // pred_fallthru
          _
        %v229 = vld [vmem:[%s185] sm:$0xff]
        %v230 = vld [vmem:[%s185 + $0x8] sm:$0xff]
        %v231 = vld [vmem:[%s194] sm:$0xff]
        %v232 = vld [vmem:[%s194 + $0x8] sm:$0xff]
        %v233 = vand.u32 2147483647, %v229
        %v234 = vand.u32 2147483647, %v230
        %v235 = vsub.f32 0.0, %v233
        %v236 = vsub.f32 0.0, %v234
        %v237 = vmul.f32 %v235, 1.442695
        %v238 = vpow.pop %v237
        %v239 = vmul.f32 %v236, 1.442695
        %v240 = vpow.pop %v239
        %v241 = vadd.f32 %v238, 1.0
        %v242 = vadd.f32 %v240, 1.0
        %v243 = vrcp.pop %v241
        %v244 = vmul.f32 1.0, %v243
        %v245 = vrcp.pop %v242
        %v246 = vmul.f32 1.0, %v245
        %vm247 = vcmp.ge.f32.partialorder %v229, 0.0
        %vm248 = vcmp.ge.f32.partialorder %v230, 0.0
        %v249 = vmul.f32 %v238, %v244
        %v250 = vmul.f32 %v240, %v246
        %v251 = vsel %vm247, %v244, %v249
        %v252 = vsel %vm248, %v246, %v250
        %v253 = vmax.f32 %v229, 0.0
        %v254 = vmax.f32 %v230, 0.0
        %v255 = vmul.f32 %v229, %v231
        %v256 = vmul.f32 %v230, %v232
        %v257 = vsub.f32 %v253, %v255
        %v258 = vsub.f32 %v254, %v256
        %v259 = vadd.f32 %v238, 1.0
        %v260 = vlog2.pop %v259
        %v261 = vmul.f32 %v260, 0.6931472
        %v262 = vmul.f32 -0.5, %v238
        %v263 = vadd.f32 %v262, 1.0
        %v264 = vmul.f32 %v263, %v238
        %v265 = vand.u32 2147483647, %v238
        %vm266 = vcmp.lt.f32.partialorder %v265, 0.0004427343
        %v267 = vsel %vm266, %v264, %v261
        %v268 = vadd.f32 %v240, 1.0
        %v269 = vlog2.pop %v268
        %v270 = vmul.f32 %v269, 0.6931472
        %v271 = vmul.f32 -0.5, %v240
        %v272 = vadd.f32 %v271, 1.0
        %v273 = vmul.f32 %v272, %v240
        %v274 = vand.u32 2147483647, %v240
        %vm275 = vcmp.lt.f32.partialorder %v274, 0.0004427343
        %v276 = vsel %vm275, %v273, %v270
        %v277 = vadd.f32 %v257, %v267
        %v278 = vadd.f32 %v258, %v276
        %v279 = vmul.f32 %v251, %v231
        %v280 = vmul.f32 %v252, %v232
        %v281 = vsub.f32 1.0, %v251
        %v282 = vsub.f32 1.0, %v252
        %v283 = vsub.f32 1.0, %v231
        %v284 = vsub.f32 1.0, %v232
        %v285 = vmul.f32 %v281, %v283
        %v286 = vmul.f32 %v282, %v284
        %v287 = vadd.f32 %v279, %v285
        %v288 = vadd.f32 %v280, %v286
        %v289 = vsub.f32 1.0, %v287
        %v290 = vsub.f32 1.0, %v288
        %v291 = vmul.f32 %v289, %v289
        %v292 = vmul.f32 %v290, %v290
        %v293 = vmul.f32 %v231, 0.25
        %v294 = vmul.f32 %v232, 0.25
        %v295 = vmul.f32 %v283, 0.75
        %v296 = vmul.f32 %v284, 0.75
        %v297 = vadd.f32 %v293, %v295
        %v298 = vadd.f32 %v294, %v296
        %v299 = vmul.f32 %v297, %v277
        %v300 = vmul.f32 %v298, %v278
        %v301 = vmul.f32 %v299, %v291
        %v302 = vmul.f32 %v300, %v292
        %v303 = vld [vmem:[#allocation2] sm:$0xff]
        %v304 = vadd.f32 %v301, %v302
        %v305 = vadd.f32 %v303, %v304
        %306 = vst [vmem:[#allocation2] sm:$0xff] %v305
        // Predicated region
        $region41: #{tpu_custom_call.1} parent=27 // pred_check
          %p307 = pneg %p224
        $region42: #{tpu_custom_call.1} parent=27 // pred_check_branch
          %309 = sbr.rel (%p307) target = $region44
        $region43: #{tpu_custom_call.1} parent=27 // pred_region
          %v310 = vld [vmem:[#allocation2] sm:$0xff]
          %311 = vst [vmem:[%s219] sm:$0xff] %v310
        $region44: #{tpu_custom_call.1} parent=27 // pred_fallthru
          _
        %s312 = sand.u32 %s98, 1
        %s313 = scalar_lea.sflag [#allocation5], %s312
        %s314 = sand.u32 %s98, 1
        %s315 = smul.addr %s314, 8
        %s316 = scalar_lea.vmem [#allocation8], %s315
        // Predicated region
        $region45: #{tpu_custom_call.1} parent=27 // pred_check
          %p317 = pneg %p108
        $region46: #{tpu_custom_call.1} parent=27 // pred_check_branch
          %319 = sbr.rel (%p317) target = $region48
        $region47: #{tpu_custom_call.1} parent=27 // pred_region
          %s321 = ssub.s32 128, 128
          %322 = vsyncadd %s313, %s321
          %s323 = smul.addr %s26, 128
          %s324 = scalar_lea.hbm %s2, %s323
          %s326 = sshll.u32 %s316, 4
          %s327 = int_to_ptr.vmem [resolvable:$true] %s326
          %329 = dma.vmem_to_hbm [thread:$0]  %s327, 128, %s324, %s313
        $region48: #{tpu_custom_call.1} parent=27 // pred_fallthru
          _
      $region28: #{tpu_custom_call.1} parent=5 // pred_fallthru
        _
      %p330 = scmp.le.s32.totalorder 2, %s17
      // Predicated region
      $region49: #{tpu_custom_call.1} parent=5 // pred_check
        %p331 = pneg %p330
      $region50: #{tpu_custom_call.1} parent=5 // pred_check_branch
        %333 = sbr.rel (%p331) target = $region52
      $region51: #{tpu_custom_call.1} parent=5 // pred_region
        %s334 = ssub.s32 %s17, 2
        // Predicated region
        $region53: #{tpu_custom_call.1} parent=51 // pred_check
          %p335 = pneg %p114
        $region54: #{tpu_custom_call.1} parent=51 // pred_check_branch
          %337 = sbr.rel (%p335) target = $region56
        $region55: #{tpu_custom_call.1} parent=51 // pred_region
          %s338 = sand.u32 %s99, 1
          %s339 = scalar_lea.sflag [#allocation5], %s338
          %s340 = sand.u32 %s99, 1
          %s341 = smul.addr %s340, 8
          %s342 = scalar_lea.vmem [#allocation8], %s341
          %343 = dma.done %s339, 128
        $region56: #{tpu_custom_call.1} parent=51 // pred_fallthru
          _
      $region52: #{tpu_custom_call.1} parent=5 // pred_fallthru
        _
    $region6: #{tpu_custom_call.1} parent=1 // loop_footer
      %s21 = sadd.s32 1, %s17
    $region7: #{tpu_custom_call.1} parent=1 // loop_footer_branch
      %16 = sbr.rel target = $region3
    $region8: #{tpu_custom_call.1} parent=1 // loop_exit
      _
    %344 = vsyncpa [#allocation4], 1
    %s345 = scalar_lea.sflag [#allocation4], 1
    %346 = vsyncpa %s345, 1
    %347 = vsyncpa [#allocation7], 1
    %s348 = scalar_lea.sflag [#allocation7], 1
    %349 = vsyncpa %s348, 1
    %350 = vsyncpa [#allocation5], 1
    %s351 = scalar_lea.sflag [#allocation5], 1
    %352 = vsyncpa %s351, 1

</llo_original>
